<compile_context>
chip_gen: v7x
topology: tpu7x:2x2x1
jax: 0.10.0
libtpu: 0.0.40
codegen_flags: <defaults>
</compile_context>

<pallas_src>
import math

import jax
import jax.numpy as jnp
from jax.experimental import pallas as pl
from jax.experimental.pallas import tpu as pltpu


# --------------------------------- kernel ---------------------------------

def _linear_kernel(x_ref, w_ref, o_ref):
    # x_ref: (tm, K)   w_ref: (K, N)   o_ref: (tm, N)
    o_ref[...] = jnp.dot(
        x_ref[...], w_ref[...], preferred_element_type=jnp.float32
    ).astype(o_ref.dtype)


# --------------------------------- wrapper ---------------------------------

def _round_up(x, m):
    return (x + m - 1) // m * m


def multi_head_dense(x, weight, *, block_rows=256):
    """y = x @ weight.T  (PyTorch F.linear(x, weight), no bias).

    x:      (..., out_ch)
    weight: (in_ch, out_ch)
    returns (..., in_ch)
    """
    in_ch, out_ch = weight.shape
    lead = x.shape[:-1]

    # Collapse all leading (batch/sequence) dims into one M axis.
    xf = x.reshape(-1, out_ch)
    m_rows = xf.shape[0]

    # Transpose the weight once, outside the kernel (lane-dense output axis).
    w_t = jnp.transpose(weight)                       # (out_ch, in_ch)

    # Row tile: multiple of 8 sublanes, dividing the (padded) row count.
    tm = min(block_rows, _round_up(m_rows, 8))
    m_pad = _round_up(m_rows, tm)
    if m_pad != m_rows:
        xf = jnp.pad(xf, ((0, m_pad - m_rows), (0, 0)))

    grid = (m_pad // tm,)

    out = pl.pallas_call(
        _linear_kernel,
        out_shape=jax.ShapeDtypeStruct((m_pad, in_ch), x.dtype),
        grid=grid,
        in_specs=[
            pl.BlockSpec((tm, out_ch), lambda i: (i, 0)),
            pl.BlockSpec((out_ch, in_ch), lambda i: (0, 0)),   # weight resident
        ],
        out_specs=pl.BlockSpec((tm, in_ch), lambda i: (i, 0)),
        compiler_params=pltpu.CompilerParams(
            dimension_semantics=("parallel",)),                # shard rows on v7x
    )(xf, w_t)

    if m_pad != m_rows:
        out = out[:m_rows]
    return out.reshape(*lead, in_ch)


# ----------------------------------- main -----------------------------------

if __name__ == "__main__":
    # x: (batch, tokens, channels) with channels = 128 (lane-dense),
    # square weight (in_ch == out_ch == 128) as typically used by the module.
    B, N, C = 2, 256, 128
    key = jax.random.PRNGKey(0)
    kx, kw = jax.random.split(key)
    x = jax.random.normal(kx, (B, N, C), jnp.float32)
    weight = jax.random.normal(kw, (C, C), jnp.float32) * (1.0 / math.sqrt(C))

    y = jax.jit(multi_head_dense)(x, weight)
    jax.block_until_ready(y)

    # Reference: F.linear(x, weight) == x @ weight.T
    ref = jnp.einsum("bno,io->bni", x, weight,
                     precision=jax.lax.Precision.HIGHEST)

    assert y.shape == (B, N, C), y.shape
    assert jnp.allclose(y, ref, rtol=1e-3, atol=1e-3), \
        float(jnp.max(jnp.abs(y - ref)))
    print("KERNEL_OK")
</pallas_src>

<mosaic_0001>
module attributes {stable_mosaic.version = 11 : i64} {
  func.func @_linear_kernel(%arg0: i32, %arg1: memref<256x128xf32, #tpu.memory_space<vmem>>, %arg2: memref<128x128xf32, #tpu.memory_space<vmem>>, %arg3: memref<256x128xf32, #tpu.memory_space<vmem>>) attributes {dimension_semantics = [#tpu.dimension_semantics<parallel>], iteration_bounds = array<i64: 2>, scalar_prefetch = 0 : i64, scratch_operands = 0 : i64, tpu.core_type = #tpu.core_type<tc>, window_params = [{transform_indices = @transform_0, window_bounds = array<i64: 256, 128>}, {pipeline_mode = #tpu.pipeline_mode<synchronous>, transform_indices = @transform_1, window_bounds = array<i64: 128, 128>}, {transform_indices = @transform_2, window_bounds = array<i64: 256, 128>}]} {
    %c0 = arith.constant 0 : index
    %c0_0 = arith.constant 0 : index
    %0 = vector.load %arg1[%c0, %c0_0] : memref<256x128xf32, #tpu.memory_space<vmem>>, vector<256x128xf32>
    %c0_1 = arith.constant 0 : index
    %c0_2 = arith.constant 0 : index
    %1 = vector.load %arg2[%c0_1, %c0_2] : memref<128x128xf32, #tpu.memory_space<vmem>>, vector<128x128xf32>
    %cst = arith.constant dense<0.000000e+00> : vector<256x128xf32>
    %2 = tpu.matmul %0, %1, %cst {dimension_numbers = #tpu.dot_dimension_numbers<[1], [0], [0], [1], [0, 0, 1, 1], [], []>} : vector<256x128xf32>, vector<128x128xf32>, vector<256x128xf32> -> vector<256x128xf32>
    %c0_3 = arith.constant 0 : index
    %c0_4 = arith.constant 0 : index
    %3 = vector.load %arg3[%c0_3, %c0_4] : memref<256x128xf32, #tpu.memory_space<vmem>>, vector<256x128xf32>
    tpu.vector_store %arg3[%c0_3, %c0_4], %2 {strides = array<i32>} : memref<256x128xf32, #tpu.memory_space<vmem>>, vector<256x128xf32>,
    return
  }
  func.func @transform_0(%arg0: i32) -> (i32, i32) {
    %c0_i32 = arith.constant 0 : i32
    %c0_i32_0 = arith.constant 0 : i32
    return %arg0, %c0_i32 : i32, i32
  }
  func.func @transform_1(%arg0: i32) -> (i32, i32) {
    %c0_i32 = arith.constant 0 : i32
    %c0_i32_0 = arith.constant 0 : i32
    %c0_i32_1 = arith.constant 0 : i32
    return %c0_i32, %c0_i32_0 : i32, i32
  }
  func.func @transform_2(%arg0: i32) -> (i32, i32) {
    %c0_i32 = arith.constant 0 : i32
    %c0_i32_0 = arith.constant 0 : i32
    return %arg0, %c0_i32 : i32, i32
  }
}

</mosaic_0001>

<llo_original>
// kernel: multi_head_dense.1
$region0: #{multi_head_dense.1}
  #allocation0 [shape = 'u32[]', space=smem, size = 0x4, offset = 0x4, fixed_abs, tag = 'smem constant byte address 0x4 - core index']
  #allocation1 [shape = 'u32[144,128]{1,0:T(1,128)}', space=vmem, size = 0x12000, scoped, tag = 'internal scratch']
  %s0 = inlined_call_operand.hbm [shape: f32[512,128], index: 0, kind: input, shape index: {}]
  %s1 = inlined_call_operand.vmem [shape: f32[128,128], index: 1, kind: input, shape index: {}]
  %s2 = inlined_call_operand.hbm [shape: f32[512,128], index: 2, kind: output, shape index: {}]
  %s3 = sld [smem:[#allocation0]]
  $region45: #{multi_head_dense.1} parent=0
    _
  %s5 = ssub.s32 1, %s3
  %s6 = scalar_select 0, %s5, %s3
  $region1: #{multi_head_dense.1} parent=0
    #allocation2 [shape = 'u8[262144]{0}', space=vmem, size = 0x40000, scoped, tag = 'input window, operand 0']
    #allocation3 [shape = 's32[2]{0}', space=sflag, size = 0x8, scoped, tag = 'scoped memory for multi_head_dense.1']
    #allocation4 [shape = 's32[2]{0}', space=sflag, size = 0x8, scoped, tag = 'scoped memory for multi_head_dense.1']
    #allocation5 [shape = 'u8[262144]{0}', space=vmem, size = 0x40000, scoped, tag = 'output window, operand 0']
    %7 = vsyncpa [#allocation3], 0
    %s8 = scalar_lea.sflag [#allocation3], 1
    %9 = vsyncpa %s8, 0
    %10 = vsyncpa [#allocation4], 0
    %s11 = scalar_lea.sflag [#allocation4], 1
    %12 = vsyncpa %s11, 0
    loop: start=0, step=1, limit=4
    $region2: #{multi_head_dense.1} parent=1 // loop_pre_header
      _
    $region3: #{multi_head_dense.1} parent=1 // loop_header
      %s14 = sphi 0, %s18
      %p15 = scmp.ge.s32.totalorder %s14, 4
      %s24 = sphi 0, %s26
      %s27 = sphi 0, %s24
      %s28 = sphi 0, %s27
      %s44 = sphi 0, %s28
      %s48 = sphi 0, %s48
      %s50 = sphi 0, %s48
      %s51 = sphi 0, %s50
      %s65 = sphi 0, %s51
      %s71 = sphi 0, %s73
      %s74 = sphi 0, %s71
      %s75 = sphi 0, %s74
      %s91 = sphi 0, %s75
    $region4: #{multi_head_dense.1} parent=1 // loop_header_branch
      %17 = sbr.rel (%p15) target = $region8
    $region5: #{multi_head_dense.1} parent=1 // loop_body
      %s19 = ssub.s32 %s14, 1
      %s20 = ssub.s32 %s14, 2
      %s21 = sadd.s32 %s14, 1
      %s22 = ssub.s32 %s14, %s21
      %p23 = scmp.eq.s32.totalorder %s22, 0
      %s25 = sadd.s32 %s24, 1
      %s26 = scalar_select %p23, %s24, %s25
      %p29 = pneg %p23
      %p30 = scmp.eq.s32.totalorder %s14, 1
      %p31 = por %p29, %p30
      %p32 = scmp.ne.s32.totalorder %s24, %s27
      %p33 = scmp.eq.s32.totalorder %s14, 0
      %p34 = por %p32, %p33
      %p35 = scmp.ne.s32.totalorder %s24, %s27
      %p36 = scmp.eq.s32.totalorder %s19, 1
      %p37 = por %p35, %p36
      %p38 = scmp.ne.s32.totalorder %s27, %s28
      %p39 = scmp.eq.s32.totalorder %s19, 0
      %p40 = por %p38, %p39
      %p41 = scmp.ne.s32.totalorder %s27, %s28
      %p42 = scmp.eq.s32.totalorder %s20, 1
      %p43 = por %p41, %p42
      %p45 = scmp.ne.s32.totalorder %s28, %s44
      %p46 = scmp.eq.s32.totalorder %s20, 0
      %p47 = por %p45, %p46
      %s49 = sadd.s32 %s48, 1
      %p52 = scmp.eq.s32.totalorder %s14, 1
      %p53 = scmp.ne.s32.totalorder %s48, %s50
      %p54 = scmp.eq.s32.totalorder %s14, 0
      %p55 = por %p53, %p54
      %p56 = scmp.ne.s32.totalorder %s48, %s50
      %p57 = scmp.eq.s32.totalorder %s19, 1
      %p58 = por %p56, %p57
      %p59 = scmp.ne.s32.totalorder %s50, %s51
      %p60 = scmp.eq.s32.totalorder %s19, 0
      %p61 = por %p59, %p60
      %p62 = scmp.ne.s32.totalorder %s50, %s51
      %p63 = scmp.eq.s32.totalorder %s20, 1
      %p64 = por %p62, %p63
      %p66 = scmp.ne.s32.totalorder %s51, %s65
      %p67 = scmp.eq.s32.totalorder %s20, 0
      %p68 = por %p66, %p67
      %s69 = ssub.s32 %s14, %s21
      %p70 = scmp.eq.s32.totalorder %s69, 0
      %s72 = sadd.s32 %s71, 1
      %s73 = scalar_select %p70, %s71, %s72
      %p76 = pneg %p70
      %p77 = scmp.eq.s32.totalorder %s14, 1
      %p78 = por %p76, %p77
      %p79 = scmp.ne.s32.totalorder %s71, %s74
      %p80 = scmp.eq.s32.totalorder %s14, 0
      %p81 = por %p79, %p80
      %p82 = scmp.ne.s32.totalorder %s71, %s74
      %p83 = scmp.eq.s32.totalorder %s19, 1
      %p84 = por %p82, %p83
      %p85 = scmp.ne.s32.totalorder %s74, %s75
      %p86 = scmp.eq.s32.totalorder %s19, 0
      %p87 = por %p85, %p86
      %p88 = scmp.ne.s32.totalorder %s74, %s75
      %p89 = scmp.eq.s32.totalorder %s20, 1
      %p90 = por %p88, %p89
      %p92 = scmp.ne.s32.totalorder %s75, %s91
      %p93 = scmp.eq.s32.totalorder %s20, 0
      %p94 = por %p92, %p93
      %p95 = scmp.le.s32.totalorder 1, %s14
      %p96 = scmp.lt.s32.totalorder %s14, 3
      %p97 = pnand %p95, %p96
      %p98 = pneg %p97
      // Predicated region
      $region9: #{multi_head_dense.1} parent=5 // pred_check
        _
      $region10: #{multi_head_dense.1} parent=5 // pred_check_branch
        %100 = sbr.rel (%p97) target = $region12
      $region11: #{multi_head_dense.1} parent=5 // pred_region
        %s101 = ssub.s32 %s14, 1
        // Predicated region
        $region13: #{multi_head_dense.1} parent=11 // pred_check
          %p102 = pneg %p61
        $region14: #{multi_head_dense.1} parent=11 // pred_check_branch
          %104 = sbr.rel (%p102) target = $region16
        $region15: #{multi_head_dense.1} parent=11 // pred_region
          _
        $region16: #{multi_head_dense.1} parent=11 // pred_fallthru
          _
      $region12: #{multi_head_dense.1} parent=5 // pred_fallthru
        _
      %p105 = scmp.lt.s32.totalorder %s14, 2
      // Predicated region
      $region17: #{multi_head_dense.1} parent=5 // pred_check
        %p106 = pneg %p105
      $region18: #{multi_head_dense.1} parent=5 // pred_check_branch
        %108 = sbr.rel (%p106) target = $region20
      $region19: #{multi_head_dense.1} parent=5 // pred_region
        // Predicated region
        $region21: #{multi_head_dense.1} parent=19 // pred_check
          %p109 = pneg %p34
        $region22: #{multi_head_dense.1} parent=19 // pred_check_branch
          %111 = sbr.rel (%p109) target = $region24
        $region23: #{multi_head_dense.1} parent=19 // pred_region
          %s112 = sand.u32 %s24, 1
          %s113 = scalar_lea.sflag [#allocation3], %s112
          %s114 = sand.u32 %s24, 1
          %s115 = smul.addr %s114, 256
          %s116 = scalar_lea.vmem [#allocation2], %s115
          %s117 = smul.u32 32, %s14
          %s119 = ssub.s32 4096, 4096
          %120 = vsyncadd %s113, %s119
          %s121 = smul.addr %s117, 128
          %s122 = scalar_lea.hbm %s0, %s121
          %s123 = sshll.u32 %s116, 4
          %s124 = int_to_ptr.vmem [resolvable:$true] %s123
          %129 = dma.hbm_to_vmem [thread:$0]  %s122, 4096, %s124, %s113, 128, 128, 8
        $region24: #{multi_head_dense.1} parent=19 // pred_fallthru
          _
      $region20: #{multi_head_dense.1} parent=5 // pred_fallthru
        _
      %p130 = scmp.le.s32.totalorder 1, %s14
      %p131 = scmp.lt.s32.totalorder %s14, 3
      %p132 = pnand %p130, %p131
      %p133 = pneg %p132
      // Predicated region
      $region25: #{multi_head_dense.1} parent=5 // pred_check
        _
      $region26: #{multi_head_dense.1} parent=5 // pred_check_branch
        %135 = sbr.rel (%p132) target = $region28
      $region27: #{multi_head_dense.1} parent=5 // pred_region
        %s136 = ssub.s32 %s14, 1
        %s137 = sand.u32 %s27, 1
        %s138 = scalar_lea.sflag [#allocation3], %s137
        %s139 = sand.u32 %s27, 1
        %s140 = smul.addr %s139, 256
        %s141 = scalar_lea.vmem [#allocation2], %s140
        // Predicated region
        $region29: #{multi_head_dense.1} parent=27 // pred_check
          %p142 = pneg %p40
        $region30: #{multi_head_dense.1} parent=27 // pred_check_branch
          %144 = sbr.rel (%p142) target = $region32
        $region31: #{multi_head_dense.1} parent=27 // pred_region
          %145 = dma.done %s138, 4096
        $region32: #{multi_head_dense.1} parent=27 // pred_fallthru
          _
        %s146 = sand.u32 %s27, 1
        %s147 = scalar_lea.sflag [#allocation3], %s146
        %s148 = sand.u32 %s27, 1
        %s149 = smul.addr %s148, 256
        %s150 = scalar_lea.vmem [#allocation2], %s149
        %p151 = pneg %p40
        %p152 = pneg %p37
        %p153 = pneg %p61
        %p154 = pneg %p58
        %p155 = pneg %p87
        %p156 = pneg %p84
        %s157 = sand.u32 %s74, 1
        %s158 = scalar_lea.sflag [#allocation4], %s157
        %s159 = sand.u32 %s74, 1
        %s160 = smul.addr %s159, 256
        %s161 = scalar_lea.vmem [#allocation5], %s160
        %s162 = smul.u32 32, %s19
        %s163 = smul.u32 32, %s19
        %v164 = vld [vmem:[%s141] sm:$0xff]
        %v165 = vld [vmem:[%s141 + $0x8] sm:$0xff]
        %v166 = vld [vmem:[%s141 + $0x10] sm:$0xff]
        %v167 = vld [vmem:[%s141 + $0x18] sm:$0xff]
        %v168 = vld [vmem:[%s141 + $0x20] sm:$0xff]
        %v169 = vld [vmem:[%s141 + $0x28] sm:$0xff]
        %v170 = vld [vmem:[%s141 + $0x30] sm:$0xff]
        %v171 = vld [vmem:[%s141 + $0x38] sm:$0xff]
        %v172 = vld [vmem:[%s141 + $0x40] sm:$0xff]
        %v173 = vld [vmem:[%s141 + $0x48] sm:$0xff]
        %v174 = vld [vmem:[%s141 + $0x50] sm:$0xff]
        %v175 = vld [vmem:[%s141 + $0x58] sm:$0xff]
        %v176 = vld [vmem:[%s141 + $0x60] sm:$0xff]
        %v177 = vld [vmem:[%s141 + $0x68] sm:$0xff]
        %v178 = vld [vmem:[%s141 + $0x70] sm:$0xff]
        %v179 = vld [vmem:[%s141 + $0x78] sm:$0xff]
        %v180 = vld [vmem:[%s141 + $0x80] sm:$0xff]
        %v181 = vld [vmem:[%s141 + $0x88] sm:$0xff]
        %v182 = vld [vmem:[%s141 + $0x90] sm:$0xff]
        %v183 = vld [vmem:[%s141 + $0x98] sm:$0xff]
        %v184 = vld [vmem:[%s141 + $0xa0] sm:$0xff]
        %v185 = vld [vmem:[%s141 + $0xa8] sm:$0xff]
        %v186 = vld [vmem:[%s141 + $0xb0] sm:$0xff]
        %v187 = vld [vmem:[%s141 + $0xb8] sm:$0xff]
        %v188 = vld [vmem:[%s141 + $0xc0] sm:$0xff]
        %v189 = vld [vmem:[%s141 + $0xc8] sm:$0xff]
        %v190 = vld [vmem:[%s141 + $0xd0] sm:$0xff]
        %v191 = vld [vmem:[%s141 + $0xd8] sm:$0xff]
        %v192 = vld [vmem:[%s141 + $0xe0] sm:$0xff]
        %v193 = vld [vmem:[%s141 + $0xe8] sm:$0xff]
        %v194 = vld [vmem:[%s141 + $0xf0] sm:$0xff]
        %v195 = vld [vmem:[%s141 + $0xf8] sm:$0xff]
        %v196 = vld [vmem:[%s1] sm:$0xff]
        %v197 = vld [vmem:[%s1 + $0x8] sm:$0xff]
        %v198 = vld [vmem:[%s1 + $0x10] sm:$0xff]
        %v199 = vld [vmem:[%s1 + $0x18] sm:$0xff]
        %v200 = vld [vmem:[%s1 + $0x20] sm:$0xff]
        %v201 = vld [vmem:[%s1 + $0x28] sm:$0xff]
        %v202 = vld [vmem:[%s1 + $0x30] sm:$0xff]
        %v203 = vld [vmem:[%s1 + $0x38] sm:$0xff]
        %v204 = vld [vmem:[%s1 + $0x40] sm:$0xff]
        %v205 = vld [vmem:[%s1 + $0x48] sm:$0xff]
        %v206 = vld [vmem:[%s1 + $0x50] sm:$0xff]
        %v207 = vld [vmem:[%s1 + $0x58] sm:$0xff]
        %v208 = vld [vmem:[%s1 + $0x60] sm:$0xff]
        %v209 = vld [vmem:[%s1 + $0x68] sm:$0xff]
        %v210 = vld [vmem:[%s1 + $0x70] sm:$0xff]
        %v211 = vld [vmem:[%s1 + $0x78] sm:$0xff]
        %212 = vmatprep.subr.mxu0 0.0
        %213 = vmatpush1.msra.mxu0 %v196
        %214 = vmatprep.subr.mxu0 0.0
        %215 = vmatpush1.msra.mxu0 %v197
        %216 = vmatprep.subr.mxu0 0.0
        %217 = vmatpush1.msra.mxu0 %v198
        %218 = vmatprep.subr.mxu0 0.0
        %219 = vmatpush1.msra.mxu0 %v199
        %220 = vmatprep.subr.mxu0 0.0
        %221 = vmatpush1.msra.mxu0 %v200
        %222 = vmatprep.subr.mxu0 0.0
        %223 = vmatpush1.msra.mxu0 %v201
        %224 = vmatprep.subr.mxu0 0.0
        %225 = vmatpush1.msra.mxu0 %v202
        %226 = vmatprep.subr.mxu0 0.0
        %227 = vmatpush1.msra.mxu0 %v203
        %228 = vmatprep.subr.mxu0 0.0
        %229 = vmatpush1.msra.mxu0 %v204
        %230 = vmatprep.subr.mxu0 0.0
        %231 = vmatpush1.msra.mxu0 %v205
        %232 = vmatprep.subr.mxu0 0.0
        %233 = vmatpush1.msra.mxu0 %v206
        %234 = vmatprep.subr.mxu0 0.0
        %235 = vmatpush1.msra.mxu0 %v207
        %236 = vmatprep.subr.mxu0 0.0
        %237 = vmatpush1.msra.mxu0 %v208
        %238 = vmatprep.subr.mxu0 0.0
        %239 = vmatpush1.msra.mxu0 %v209
        %240 = vmatprep.subr.mxu0 0.0
        %241 = vmatpush1.msra.mxu0 %v210
        %242 = vmatprep.subr.mxu0 0.0
        %243 = vmatpush1.msra.mxu0 %v211
        %244 = vmatprep.subr.mxu0 0.0
        %245 = vmatpush1.msra.mxu0 0.0
        %246 = vmatprep.subr.mxu0 0.0
        %247 = vmatpush1.msra.mxu0 0.0
        %248 = vmatprep.subr.mxu0 0.0
        %249 = vmatpush1.msra.mxu0 0.0
        %250 = vmatprep.subr.mxu0 0.0
        %251 = vmatpush1.msra.mxu0 0.0
        %252 = vmatprep.subr.mxu0 0.0
        %253 = vmatpush1.msra.mxu0 0.0
        %254 = vmatprep.subr.mxu0 0.0
        %255 = vmatpush1.msra.mxu0 0.0
        %256 = vmatprep.subr.mxu0 0.0
        %257 = vmatpush1.msra.mxu0 0.0
        %258 = vmatprep.subr.mxu0 0.0
        %259 = vmatpush1.msra.mxu0 0.0
        %260 = vmatprep.subr.mxu0 0.0
        %261 = vmatpush1.msra.mxu0 0.0
        %262 = vmatprep.subr.mxu0 0.0
        %263 = vmatpush1.msra.mxu0 0.0
        %264 = vmatprep.subr.mxu0 0.0
        %265 = vmatpush1.msra.mxu0 0.0
        %266 = vmatprep.subr.mxu0 0.0
        %267 = vmatpush1.msra.mxu0 0.0
        %268 = vmatprep.subr.mxu0 0.0
        %269 = vmatpush1.msra.mxu0 0.0
        %270 = vmatprep.subr.mxu0 0.0
        %271 = vmatpush1.msra.mxu0 0.0
        %272 = vmatprep.subr.mxu0 0.0
        %273 = vmatpush1.msra.mxu0 0.0
        %274 = vmatprep.subr.mxu0 0.0
        %275 = vmatpush1.msra.mxu0 0.0
        %276 = vmatprep.mubr.f32.mxu0 0.0
        %277 = vmatmul.mubr.f32.gmra.mrb[0].mxu0 %v164
        %v278 = vpop.f32.mrb[0].mxu0
        %v279 = vadd.f32 0.0, %v278
        %v280 = vpop.f32.mrb[0].mxu0
        %281 = vmatprep.mubr.f32.mxu0 0.0
        %282 = vmatmul.mubr.f32.gmra.mrb[0].mxu0 %v165
        %v283 = vpop.f32.mrb[0].mxu0
        %v284 = vadd.f32 0.0, %v283
        %v285 = vpop.f32.mrb[0].mxu0
        %286 = vmatprep.mubr.f32.mxu0 0.0
        %287 = vmatmul.mubr.f32.gmra.mrb[0].mxu0 %v166
        %v288 = vpop.f32.mrb[0].mxu0
        %v289 = vadd.f32 0.0, %v288
        %v290 = vpop.f32.mrb[0].mxu0
        %291 = vmatprep.mubr.f32.mxu0 0.0
        %292 = vmatmul.mubr.f32.gmra.mrb[0].mxu0 %v167
        %v293 = vpop.f32.mrb[0].mxu0
        %v294 = vadd.f32 0.0, %v293
        %v295 = vpop.f32.mrb[0].mxu0
        %296 = vmatprep.mubr.f32.mxu0 0.0
        %297 = vmatmul.mubr.f32.gmra.mrb[0].mxu0 %v168
        %v298 = vpop.f32.mrb[0].mxu0
        %v299 = vadd.f32 0.0, %v298
        %v300 = vpop.f32.mrb[0].mxu0
        %301 = vmatprep.mubr.f32.mxu0 0.0
        %302 = vmatmul.mubr.f32.gmra.mrb[0].mxu0 %v169
        %v303 = vpop.f32.mrb[0].mxu0
        %v304 = vadd.f32 0.0, %v303
        %v305 = vpop.f32.mrb[0].mxu0
        %306 = vmatprep.mubr.f32.mxu0 0.0
        %307 = vmatmul.mubr.f32.gmra.mrb[0].mxu0 %v170
        %v308 = vpop.f32.mrb[0].mxu0
        %v309 = vadd.f32 0.0, %v308
        %v310 = vpop.f32.mrb[0].mxu0
        %311 = vmatprep.mubr.f32.mxu0 0.0
        %312 = vmatmul.mubr.f32.gmra.mrb[0].mxu0 %v171
        %v313 = vpop.f32.mrb[0].mxu0
        %v314 = vadd.f32 0.0, %v313
        %v315 = vpop.f32.mrb[0].mxu0
        %316 = vmatprep.mubr.f32.mxu0 0.0
        %317 = vmatmul.mubr.f32.gmra.mrb[0].mxu0 %v172
        %v318 = vpop.f32.mrb[0].mxu0
        %v319 = vadd.f32 0.0, %v318
        %v320 = vpop.f32.mrb[0].mxu0
        %321 = vmatprep.mubr.f32.mxu0 0.0
        %322 = vmatmul.mubr.f32.gmra.mrb[0].mxu0 %v173
        %v323 = vpop.f32.mrb[0].mxu0
        %v324 = vadd.f32 0.0, %v323
        %v325 = vpop.f32.mrb[0].mxu0
        %326 = vmatprep.mubr.f32.mxu0 0.0
        %327 = vmatmul.mubr.f32.gmra.mrb[0].mxu0 %v174
        %v328 = vpop.f32.mrb[0].mxu0
        %v329 = vadd.f32 0.0, %v328
        %v330 = vpop.f32.mrb[0].mxu0
        %331 = vmatprep.mubr.f32.mxu0 0.0
        %332 = vmatmul.mubr.f32.gmra.mrb[0].mxu0 %v175
        %v333 = vpop.f32.mrb[0].mxu0
        %v334 = vadd.f32 0.0, %v333
        %v335 = vpop.f32.mrb[0].mxu0
        %336 = vmatprep.mubr.f32.mxu0 0.0
        %337 = vmatmul.mubr.f32.gmra.mrb[0].mxu0 %v176
        %v338 = vpop.f32.mrb[0].mxu0
        %v339 = vadd.f32 0.0, %v338
        %v340 = vpop.f32.mrb[0].mxu0
        %341 = vmatprep.mubr.f32.mxu0 0.0
        %342 = vmatmul.mubr.f32.gmra.mrb[0].mxu0 %v177
        %v343 = vpop.f32.mrb[0].mxu0
        %v344 = vadd.f32 0.0, %v343
        %v345 = vpop.f32.mrb[0].mxu0
        %346 = vmatprep.mubr.f32.mxu0 0.0
        %347 = vmatmul.mubr.f32.gmra.mrb[0].mxu0 %v178
        %v348 = vpop.f32.mrb[0].mxu0
        %v349 = vadd.f32 0.0, %v348
        %v350 = vpop.f32.mrb[0].mxu0
        %351 = vmatprep.mubr.f32.mxu0 0.0
        %352 = vmatmul.mubr.f32.gmra.mrb[0].mxu0 %v179
        %v353 = vpop.f32.mrb[0].mxu0
        %v354 = vadd.f32 0.0, %v353
        %v355 = vpop.f32.mrb[0].mxu0
        %356 = vmatprep.mubr.f32.mxu0 0.0
        %357 = vmatmul.mubr.f32.gmra.mrb[0].mxu0 %v180
        %v358 = vpop.f32.mrb[0].mxu0
        %v359 = vadd.f32 0.0, %v358
        %v360 = vpop.f32.mrb[0].mxu0
        %361 = vmatprep.mubr.f32.mxu0 0.0
        %362 = vmatmul.mubr.f32.gmra.mrb[0].mxu0 %v181
        %v363 = vpop.f32.mrb[0].mxu0
        %v364 = vadd.f32 0.0, %v363
        %v365 = vpop.f32.mrb[0].mxu0
        %366 = vmatprep.mubr.f32.mxu0 0.0
        %367 = vmatmul.mubr.f32.gmra.mrb[0].mxu0 %v182
        %v368 = vpop.f32.mrb[0].mxu0
        %v369 = vadd.f32 0.0, %v368
        %v370 = vpop.f32.mrb[0].mxu0
        %371 = vmatprep.mubr.f32.mxu0 0.0
        %372 = vmatmul.mubr.f32.gmra.mrb[0].mxu0 %v183
        %v373 = vpop.f32.mrb[0].mxu0
        %v374 = vadd.f32 0.0, %v373
        %v375 = vpop.f32.mrb[0].mxu0
        %376 = vmatprep.mubr.f32.mxu0 0.0
        %377 = vmatmul.mubr.f32.gmra.mrb[0].mxu0 %v184
        %v378 = vpop.f32.mrb[0].mxu0
        %v379 = vadd.f32 0.0, %v378
        %v380 = vpop.f32.mrb[0].mxu0
        %381 = vmatprep.mubr.f32.mxu0 0.0
        %382 = vmatmul.mubr.f32.gmra.mrb[0].mxu0 %v185
        %v383 = vpop.f32.mrb[0].mxu0
        %v384 = vadd.f32 0.0, %v383
        %v385 = vpop.f32.mrb[0].mxu0
        %386 = vmatprep.mubr.f32.mxu0 0.0
        %387 = vmatmul.mubr.f32.gmra.mrb[0].mxu0 %v186
        %v388 = vpop.f32.mrb[0].mxu0
        %v389 = vadd.f32 0.0, %v388
        %v390 = vpop.f32.mrb[0].mxu0
        %391 = vmatprep.mubr.f32.mxu0 0.0
        %392 = vmatmul.mubr.f32.gmra.mrb[0].mxu0 %v187
        %v393 = vpop.f32.mrb[0].mxu0
        %v394 = vadd.f32 0.0, %v393
        %v395 = vpop.f32.mrb[0].mxu0
        %396 = vmatprep.mubr.f32.mxu0 0.0
        %397 = vmatmul.mubr.f32.gmra.mrb[0].mxu0 %v188
        %v398 = vpop.f32.mrb[0].mxu0
        %v399 = vadd.f32 0.0, %v398
        %v400 = vpop.f32.mrb[0].mxu0
        %401 = vmatprep.mubr.f32.mxu0 0.0
        %402 = vmatmul.mubr.f32.gmra.mrb[0].mxu0 %v189
        %v403 = vpop.f32.mrb[0].mxu0
        %v404 = vadd.f32 0.0, %v403
        %v405 = vpop.f32.mrb[0].mxu0
        %406 = vmatprep.mubr.f32.mxu0 0.0
        %407 = vmatmul.mubr.f32.gmra.mrb[0].mxu0 %v190
        %v408 = vpop.f32.mrb[0].mxu0
        %v409 = vadd.f32 0.0, %v408
        %v410 = vpop.f32.mrb[0].mxu0
        %411 = vmatprep.mubr.f32.mxu0 0.0
        %412 = vmatmul.mubr.f32.gmra.mrb[0].mxu0 %v191
        %v413 = vpop.f32.mrb[0].mxu0
        %v414 = vadd.f32 0.0, %v413
        %v415 = vpop.f32.mrb[0].mxu0
        %416 = vmatprep.mubr.f32.mxu0 0.0
        %417 = vmatmul.mubr.f32.gmra.mrb[0].mxu0 %v192
        %v418 = vpop.f32.mrb[0].mxu0
        %v419 = vadd.f32 0.0, %v418
        %v420 = vpop.f32.mrb[0].mxu0
        %421 = vmatprep.mubr.f32.mxu0 0.0
        %422 = vmatmul.mubr.f32.gmra.mrb[0].mxu0 %v193
        %v423 = vpop.f32.mrb[0].mxu0
        %v424 = vadd.f32 0.0, %v423
        %v425 = vpop.f32.mrb[0].mxu0
        %426 = vmatprep.mubr.f32.mxu0 0.0
        %427 = vmatmul.mubr.f32.gmra.mrb[0].mxu0 %v194
        %v428 = vpop.f32.mrb[0].mxu0
        %v429 = vadd.f32 0.0, %v428
        %v430 = vpop.f32.mrb[0].mxu0
        %431 = vmatprep.mubr.f32.mxu0 0.0
        %432 = vmatmul.mubr.f32.gmra.mrb[0].mxu0 %v195
        %v433 = vpop.f32.mrb[0].mxu0
        %v434 = vadd.f32 0.0, %v433
        %v435 = vpop.f32.mrb[0].mxu0
        %436 = vdwg.mxu0
        %437 = vst [vmem:[%s161] sm:$0xff] %v279
        %438 = vst [vmem:[%s161 + $0x8] sm:$0xff] %v284
        %439 = vst [vmem:[%s161 + $0x10] sm:$0xff] %v289
        %440 = vst [vmem:[%s161 + $0x18] sm:$0xff] %v294
        %441 = vst [vmem:[%s161 + $0x20] sm:$0xff] %v299
        %442 = vst [vmem:[%s161 + $0x28] sm:$0xff] %v304
        %443 = vst [vmem:[%s161 + $0x30] sm:$0xff] %v309
        %444 = vst [vmem:[%s161 + $0x38] sm:$0xff] %v314
        %445 = vst [vmem:[%s161 + $0x40] sm:$0xff] %v319
        %446 = vst [vmem:[%s161 + $0x48] sm:$0xff] %v324
        %447 = vst [vmem:[%s161 + $0x50] sm:$0xff] %v329
        %448 = vst [vmem:[%s161 + $0x58] sm:$0xff] %v334
        %449 = vst [vmem:[%s161 + $0x60] sm:$0xff] %v339
        %450 = vst [vmem:[%s161 + $0x68] sm:$0xff] %v344
        %451 = vst [vmem:[%s161 + $0x70] sm:$0xff] %v349
        %452 = vst [vmem:[%s161 + $0x78] sm:$0xff] %v354
        %453 = vst [vmem:[%s161 + $0x80] sm:$0xff] %v359
        %454 = vst [vmem:[%s161 + $0x88] sm:$0xff] %v364
        %455 = vst [vmem:[%s161 + $0x90] sm:$0xff] %v369
        %456 = vst [vmem:[%s161 + $0x98] sm:$0xff] %v374
        %457 = vst [vmem:[%s161 + $0xa0] sm:$0xff] %v379
        %458 = vst [vmem:[%s161 + $0xa8] sm:$0xff] %v384
        %459 = vst [vmem:[%s161 + $0xb0] sm:$0xff] %v389
        %460 = vst [vmem:[%s161 + $0xb8] sm:$0xff] %v394
        %461 = vst [vmem:[%s161 + $0xc0] sm:$0xff] %v399
        %462 = vst [vmem:[%s161 + $0xc8] sm:$0xff] %v404
        %463 = vst [vmem:[%s161 + $0xd0] sm:$0xff] %v409
        %464 = vst [vmem:[%s161 + $0xd8] sm:$0xff] %v414
        %465 = vst [vmem:[%s161 + $0xe0] sm:$0xff] %v419
        %466 = vst [vmem:[%s161 + $0xe8] sm:$0xff] %v424
        %467 = vst [vmem:[%s161 + $0xf0] sm:$0xff] %v429
        %468 = vst [vmem:[%s161 + $0xf8] sm:$0xff] %v434
        %s469 = sand.u32 %s74, 1
        %s470 = scalar_lea.sflag [#allocation4], %s469
        %s471 = sand.u32 %s74, 1
        %s472 = smul.addr %s471, 256
        %s473 = scalar_lea.vmem [#allocation5], %s472
        // Predicated region
        $region33: #{multi_head_dense.1} parent=27 // pred_check
          %p474 = pneg %p84
        $region34: #{multi_head_dense.1} parent=27 // pred_check_branch
          %476 = sbr.rel (%p474) target = $region36
        $region35: #{multi_head_dense.1} parent=27 // pred_region
          %s477 = smul.u32 32, %s19
          %s479 = ssub.s32 4096, 4096
          %480 = vsyncadd %s470, %s479
          %s481 = smul.addr %s477, 128
          %s482 = scalar_lea.hbm %s2, %s481
          %s483 = sshll.u32 %s473, 4
          %s484 = int_to_ptr.vmem [resolvable:$true] %s483
          %489 = dma.vmem_to_hbm [thread:$0]  %s484, 4096, %s482, %s470, 128, 128, 8
        $region36: #{multi_head_dense.1} parent=27 // pred_fallthru
          _
      $region28: #{multi_head_dense.1} parent=5 // pred_fallthru
        _
      %p490 = scmp.le.s32.totalorder 2, %s14
      // Predicated region
      $region37: #{multi_head_dense.1} parent=5 // pred_check
        %p491 = pneg %p490
      $region38: #{multi_head_dense.1} parent=5 // pred_check_branch
        %493 = sbr.rel (%p491) target = $region40
      $region39: #{multi_head_dense.1} parent=5 // pred_region
        %s494 = ssub.s32 %s14, 2
        // Predicated region
        $region41: #{multi_head_dense.1} parent=39 // pred_check
          %p495 = pneg %p90
        $region42: #{multi_head_dense.1} parent=39 // pred_check_branch
          %497 = sbr.rel (%p495) target = $region44
        $region43: #{multi_head_dense.1} parent=39 // pred_region
          %s498 = sand.u32 %s75, 1
          %s499 = scalar_lea.sflag [#allocation4], %s498
          %s500 = sand.u32 %s75, 1
          %s501 = smul.addr %s500, 256
          %s502 = scalar_lea.vmem [#allocation5], %s501
          %503 = dma.done %s499, 4096
        $region44: #{multi_head_dense.1} parent=39 // pred_fallthru
          _
      $region40: #{multi_head_dense.1} parent=5 // pred_fallthru
        _
    $region6: #{multi_head_dense.1} parent=1 // loop_footer
      %s18 = sadd.s32 1, %s14
    $region7: #{multi_head_dense.1} parent=1 // loop_footer_branch
      %13 = sbr.rel target = $region3
    $region8: #{multi_head_dense.1} parent=1 // loop_exit
      _
    %504 = vsyncpa [#allocation3], 1
    %s505 = scalar_lea.sflag [#allocation3], 1
    %506 = vsyncpa %s505, 1
    %507 = vsyncpa [#allocation4], 1
    %s508 = scalar_lea.sflag [#allocation4], 1
    %509 = vsyncpa %s508, 1

</llo_original>
